<compile_context>
chip_gen: v6e
topology: v6e:2x2x1
jax: 0.10.0
libtpu: 0.0.40
codegen_flags: <defaults>
</compile_context>

<pallas_src>
import jax
import jax.numpy as jnp
from jax.experimental import pallas as pl
from jax.experimental.pallas import tpu as pltpu


_LANE = 128          # TPU lane width (last-dim tiling)
_MAX_HW_TILE = 4096  # soft cap on lanes per tile (85%+ of roofline by ~512)


def _vmem_budget():
    """Per-generation (block_budget, vmem_limit) in bytes."""
    try:
        cap = pltpu.get_tpu_info().vmem_capacity_bytes
    except Exception:  # pragma: no cover - older jax / interpret mode
        cap = 64 << 20
    # Keep the scoped limit well under physical VMEM; block budget at half
    # the limit leaves headroom for Mosaic internal scratch.
    limit = min((cap * 3) // 4, 96 << 20)
    return limit // 2, limit


def _make_kernel(specs, c_offsets):
    """specs: list of (kind, C, T) with kind in {"5d","4d"}; static channel offsets."""

    def kernel(*refs):
        in_refs = refs[: len(specs)]
        out_ref = refs[len(specs)]
        for (kind, c, t_steps), off, r in zip(specs, c_offsets, in_refs):
            if kind == "5d":
                # r block: (T, 1, C, THW) -> mean over T, accumulated in f32,
                # cast to the output dtype only at the store.
                acc = r[0].astype(jnp.float32)
                for t in range(1, t_steps):
                    acc = acc + r[t].astype(jnp.float32)
                acc = acc * jnp.float32(1.0 / t_steps)
                out_ref[:, off:off + c, :] = acc.astype(out_ref.dtype)
            else:
                # r block: (1, C, THW) -> copy (with in-kernel cast) into its
                # channel slice.
                out_ref[:, off:off + c, :] = r[...].astype(out_ref.dtype)

    return kernel


def ms_concat(xs):
    """Pallas implementation of MS_Concat(dimension=1).forward(xs)."""
    if not xs:
        raise ValueError("MS_Concat needs at least one input")

    out_dtype = jnp.result_type(*[x.dtype for x in xs])

    specs, flat = [], []
    N = H = W = None
    any_5d = False
    for x in xs:
        if x.ndim == 5:
            t, n, c, h, w = x.shape
            specs.append(("5d", c, t))
            any_5d = True
            flat.append(x.reshape(t, n, c, h * w))   # metadata-only reshape
        elif x.ndim == 4:
            n, c, h, w = x.shape
            specs.append(("4d", c, 1))
            flat.append(x.reshape(n, c, h * w))
        else:
            raise ValueError("MS_Concat expects 4-D or 5-D tensors")
        if N is None:
            N, H, W = n, h, w
        elif (n, h, w) != (N, H, W):
            raise ValueError(
                f"inconsistent N/H/W: got {(n, h, w)}, expected {(N, H, W)}")

    if any_5d and not jnp.issubdtype(out_dtype, jnp.floating):
        # torch.mean on integer tensors errors; don't silently truncate.
        raise ValueError(
            "MS_Concat: mean over time requires floating inputs, got "
            f"result dtype {out_dtype}")

    c_total = sum(c for _, c, _ in specs)
    # NOTE: channel offsets aligned to the dtype's sublane packing (8 for f32,
    # 16 for bf16) keep the stores unmasked; misaligned offsets are still
    # correct, just hit masked vst + cross-sublane selects.
    c_offsets, off = [], 0
    for _, c, _ in specs:
        c_offsets.append(off)
        off += c

    hw = H * W
    out_itemsize = jnp.dtype(out_dtype).itemsize

    # VMEM bytes needed per output-lane column:
    #   x2 for Pallas double-buffering of every input block and the output
    #   block, plus f32 accumulator / cast temporaries for the 5-D mean path.
    bytes_per_lane = 0
    for (kind, c, t), f in zip(specs, flat):
        in_itemsize = jnp.dtype(f.dtype).itemsize
        bytes_per_lane += 2 * (t if kind == "5d" else 1) * c * in_itemsize
    bytes_per_lane += 2 * c_total * out_itemsize
    bytes_per_lane += 4 * (sum(c for k, c, _ in specs if k == "5d") + c_total)

    block_budget, vmem_limit = _vmem_budget()
    hw128 = _LANE * pl.cdiv(hw, _LANE)
    max_thw = max(_LANE, ((block_budget // bytes_per_lane) // _LANE) * _LANE)
    max_thw = min(max_thw, _MAX_HW_TILE)
    thw = min(hw128, max_thw)
    num_hw_tiles = pl.cdiv(hw, thw)      # last tile may be partial (masked)

    in_specs = []
    for (kind, c, t), f in zip(specs, flat):
        if kind == "5d":
            in_specs.append(
                pl.BlockSpec((t, 1, c, thw), lambda j, n: (0, n, 0, j)))
        else:
            in_specs.append(
                pl.BlockSpec((1, c, thw), lambda j, n: (n, 0, j)))
    out_spec = pl.BlockSpec((1, c_total, thw), lambda j, n: (n, 0, j))

    # Advisory cost hint: ~T adds+scale per element for each 5-D input, and
    # exactly one HBM read of every input + one HBM write of the output.
    flops = N * hw * sum(t * c for kind, c, t in specs if kind == "5d")
    bytes_accessed = (sum(int(x.size) * jnp.dtype(x.dtype).itemsize for x in xs)
                      + N * c_total * hw * out_itemsize)

    out = pl.pallas_call(
        _make_kernel(specs, c_offsets),
        grid=(num_hw_tiles, N),
        in_specs=in_specs,
        out_specs=out_spec,
        out_shape=jax.ShapeDtypeStruct((N, c_total, hw), out_dtype),
        compiler_params=pltpu.CompilerParams(
            dimension_semantics=("parallel", "parallel"),
            vmem_limit_bytes=vmem_limit,
        ),
        cost_estimate=pl.CostEstimate(
            flops=flops, transcendentals=0, bytes_accessed=bytes_accessed),
    )(*flat)

    return out.reshape(N, c_total, H, W)


if __name__ == "__main__":
    key = jax.random.PRNGKey(0)
    k1, k2, k3, k4, k5 = jax.random.split(key, 5)

    # Case 1: H*W = 400 (NOT a multiple of 128) -> exercises the masked
    # partial last HW tile with no wrapper-side pad/slice.
    T, N, H, W = 4, 2, 20, 20
    x5a = jax.random.normal(k1, (T, N, 8, H, W), jnp.float32)
    x4 = jax.random.normal(k2, (N, 8, H, W), jnp.float32)
    x5b = jax.random.normal(k3, (T, N, 16, H, W), jnp.float32)

    out = ms_concat([x5a, x4, x5b])
    jax.block_until_ready(out)

    ref = jnp.concatenate([x5a.mean(0), x4, x5b.mean(0)], axis=1)
    assert out.shape == (N, 8 + 8 + 16, H, W), out.shape
    assert jnp.allclose(out, ref, atol=1e-5, rtol=1e-5)

    # Case 2: mixed dtypes (bf16 spikes + f32 feature map) -> in-kernel casts,
    # lane-dense 16x16 spatial.
    H2 = W2 = 16
    y5 = (jax.random.normal(k4, (T, N, 8, H2, W2), jnp.float32)
          .astype(jnp.bfloat16))
    y4 = jax.random.normal(k5, (N, 8, H2, W2), jnp.float32)

    out2 = ms_concat([y5, y4])
    jax.block_until_ready(out2)

    ref2 = jnp.concatenate([y5.astype(jnp.float32).mean(0), y4], axis=1)
    assert out2.shape == (N, 16, H2, W2), out2.shape
    assert out2.dtype == jnp.float32
    assert jnp.allclose(out2, ref2, atol=1e-2, rtol=1e-2)

    print("KERNEL_OK")
</pallas_src>

<mosaic_0001>
module attributes {stable_mosaic.version = 11 : i64} {
  func.func @kernel(%arg0: i32, %arg1: i32, %arg2: memref<4x1x8x512xf32, #tpu.memory_space<vmem>>, %arg3: memref<1x8x512xf32, #tpu.memory_space<vmem>>, %arg4: memref<4x1x16x512xf32, #tpu.memory_space<vmem>>, %arg5: memref<1x32x512xf32, #tpu.memory_space<vmem>>) attributes {dimension_semantics = [#tpu.dimension_semantics<parallel>, #tpu.dimension_semantics<parallel>], iteration_bounds = array<i64: 1, 2>, scalar_prefetch = 0 : i64, scratch_operands = 0 : i64, tpu.core_type = #tpu.core_type<tc>, window_params = [{transform_indices = @transform_0, window_bounds = array<i64: 4, 1, 8, 512>}, {transform_indices = @transform_1, window_bounds = array<i64: 1, 8, 512>}, {transform_indices = @transform_2, window_bounds = array<i64: 4, 1, 16, 512>}, {transform_indices = @transform_3, window_bounds = array<i64: 1, 32, 512>}]} {
    %c0 = arith.constant 0 : index
    %c0_0 = arith.constant 0 : index
    %c0_1 = arith.constant 0 : index
    %c0_2 = arith.constant 0 : index
    %0 = vector.load %arg2[%c0, %c0_0, %c0_1, %c0_2] : memref<4x1x8x512xf32, #tpu.memory_space<vmem>>, vector<1x1x8x512xf32>
    %1 = vector.shape_cast %0 : vector<1x1x8x512xf32> to vector<1x8x512xf32>
    %c1 = arith.constant 1 : index
    %c0_3 = arith.constant 0 : index
    %c0_4 = arith.constant 0 : index
    %c0_5 = arith.constant 0 : index
    %2 = vector.load %arg2[%c1, %c0_3, %c0_4, %c0_5] : memref<4x1x8x512xf32, #tpu.memory_space<vmem>>, vector<1x1x8x512xf32>
    %3 = vector.shape_cast %2 : vector<1x1x8x512xf32> to vector<1x8x512xf32>
    %4 = arith.addf %1, %3 : vector<1x8x512xf32>
    %c2 = arith.constant 2 : index
    %c0_6 = arith.constant 0 : index
    %c0_7 = arith.constant 0 : index
    %c0_8 = arith.constant 0 : index
    %5 = vector.load %arg2[%c2, %c0_6, %c0_7, %c0_8] : memref<4x1x8x512xf32, #tpu.memory_space<vmem>>, vector<1x1x8x512xf32>
    %6 = vector.shape_cast %5 : vector<1x1x8x512xf32> to vector<1x8x512xf32>
    %7 = arith.addf %4, %6 : vector<1x8x512xf32>
    %c3 = arith.constant 3 : index
    %c0_9 = arith.constant 0 : index
    %c0_10 = arith.constant 0 : index
    %c0_11 = arith.constant 0 : index
    %8 = vector.load %arg2[%c3, %c0_9, %c0_10, %c0_11] : memref<4x1x8x512xf32, #tpu.memory_space<vmem>>, vector<1x1x8x512xf32>
    %9 = vector.shape_cast %8 : vector<1x1x8x512xf32> to vector<1x8x512xf32>
    %10 = arith.addf %7, %9 : vector<1x8x512xf32>
    %cst = arith.constant 2.500000e-01 : f32
    %11 = vector.broadcast %cst : f32 to vector<1x8x512xf32>
    %12 = arith.mulf %10, %11 : vector<1x8x512xf32>
    %c0_12 = arith.constant 0 : index
    %c0_13 = arith.constant 0 : index
    %c0_14 = arith.constant 0 : index
    %13 = vector.load %arg5[%c0_12, %c0_13, %c0_14] : memref<1x32x512xf32, #tpu.memory_space<vmem>>, vector<1x8x512xf32>
    tpu.vector_store %arg5[%c0_12, %c0_13, %c0_14], %12 {strides = array<i32>} : memref<1x32x512xf32, #tpu.memory_space<vmem>>, vector<1x8x512xf32>,
    %c0_15 = arith.constant 0 : index
    %c0_16 = arith.constant 0 : index
    %c0_17 = arith.constant 0 : index
    %14 = vector.load %arg3[%c0_15, %c0_16, %c0_17] : memref<1x8x512xf32, #tpu.memory_space<vmem>>, vector<1x8x512xf32>
    %c0_18 = arith.constant 0 : index
    %c8 = arith.constant 8 : index
    %c0_19 = arith.constant 0 : index
    %15 = vector.load %arg5[%c0_18, %c8, %c0_19] : memref<1x32x512xf32, #tpu.memory_space<vmem>>, vector<1x8x512xf32>
    tpu.vector_store %arg5[%c0_18, %c8, %c0_19], %14 {strides = array<i32>} : memref<1x32x512xf32, #tpu.memory_space<vmem>>, vector<1x8x512xf32>,
    %c0_20 = arith.constant 0 : index
    %c0_21 = arith.constant 0 : index
    %c0_22 = arith.constant 0 : index
    %c0_23 = arith.constant 0 : index
    %16 = vector.load %arg4[%c0_20, %c0_21, %c0_22, %c0_23] : memref<4x1x16x512xf32, #tpu.memory_space<vmem>>, vector<1x1x16x512xf32>
    %17 = vector.shape_cast %16 : vector<1x1x16x512xf32> to vector<1x16x512xf32>
    %c1_24 = arith.constant 1 : index
    %c0_25 = arith.constant 0 : index
    %c0_26 = arith.constant 0 : index
    %c0_27 = arith.constant 0 : index
    %18 = vector.load %arg4[%c1_24, %c0_25, %c0_26, %c0_27] : memref<4x1x16x512xf32, #tpu.memory_space<vmem>>, vector<1x1x16x512xf32>
    %19 = vector.shape_cast %18 : vector<1x1x16x512xf32> to vector<1x16x512xf32>
    %20 = arith.addf %17, %19 : vector<1x16x512xf32>
    %c2_28 = arith.constant 2 : index
    %c0_29 = arith.constant 0 : index
    %c0_30 = arith.constant 0 : index
    %c0_31 = arith.constant 0 : index
    %21 = vector.load %arg4[%c2_28, %c0_29, %c0_30, %c0_31] : memref<4x1x16x512xf32, #tpu.memory_space<vmem>>, vector<1x1x16x512xf32>
    %22 = vector.shape_cast %21 : vector<1x1x16x512xf32> to vector<1x16x512xf32>
    %23 = arith.addf %20, %22 : vector<1x16x512xf32>
    %c3_32 = arith.constant 3 : index
    %c0_33 = arith.constant 0 : index
    %c0_34 = arith.constant 0 : index
    %c0_35 = arith.constant 0 : index
    %24 = vector.load %arg4[%c3_32, %c0_33, %c0_34, %c0_35] : memref<4x1x16x512xf32, #tpu.memory_space<vmem>>, vector<1x1x16x512xf32>
    %25 = vector.shape_cast %24 : vector<1x1x16x512xf32> to vector<1x16x512xf32>
    %26 = arith.addf %23, %25 : vector<1x16x512xf32>
    %cst_36 = arith.constant 2.500000e-01 : f32
    %27 = vector.broadcast %cst_36 : f32 to vector<1x16x512xf32>
    %28 = arith.mulf %26, %27 : vector<1x16x512xf32>
    %c0_37 = arith.constant 0 : index
    %c16 = arith.constant 16 : index
    %c0_38 = arith.constant 0 : index
    %29 = vector.load %arg5[%c0_37, %c16, %c0_38] : memref<1x32x512xf32, #tpu.memory_space<vmem>>, vector<1x16x512xf32>
    tpu.vector_store %arg5[%c0_37, %c16, %c0_38], %28 {strides = array<i32>} : memref<1x32x512xf32, #tpu.memory_space<vmem>>, vector<1x16x512xf32>,
    return
  }
  func.func @transform_0(%arg0: i32, %arg1: i32) -> (i32, i32, i32, i32) {
    %c0_i32 = arith.constant 0 : i32
    %c0_i32_0 = arith.constant 0 : i32
    %c0_i32_1 = arith.constant 0 : i32
    return %c0_i32, %arg1, %c0_i32_0, %arg0 : i32, i32, i32, i32
  }
  func.func @transform_1(%arg0: i32, %arg1: i32) -> (i32, i32, i32) {
    %c0_i32 = arith.constant 0 : i32
    %c0_i32_0 = arith.constant 0 : i32
    return %arg1, %c0_i32, %arg0 : i32, i32, i32
  }
  func.func @transform_2(%arg0: i32, %arg1: i32) -> (i32, i32, i32, i32) {
    %c0_i32 = arith.constant 0 : i32
    %c0_i32_0 = arith.constant 0 : i32
    %c0_i32_1 = arith.constant 0 : i32
    return %c0_i32, %arg1, %c0_i32_0, %arg0 : i32, i32, i32, i32
  }
  func.func @transform_3(%arg0: i32, %arg1: i32) -> (i32, i32, i32) {
    %c0_i32 = arith.constant 0 : i32
    %c0_i32_0 = arith.constant 0 : i32
    return %arg1, %c0_i32, %arg0 : i32, i32, i32
  }
}

</mosaic_0001>

<llo_original>
// kernel: tpu_custom_call.1
$region0: #{tpu_custom_call.1}
  #allocation0 [shape = 'u32[]', space=smem, size = 0x4, offset = 0x4, fixed_abs, tag = 'smem constant byte address 0x4 - core index']
  #allocation1 [shape = 'u32[144,128]{1,0:T(1,128)}', space=vmem, size = 0x12000, scoped, tag = 'internal scratch']
  #allocation9 [shape = 's32[]', space=sflag, size = 0x4, offset = 0, fixed_abs, tag = 'sflag constant byte address 0x0 - dummy sync flag']
  %s0 = inlined_call_operand.hbm [shape: f32[4,2,8,400], index: 0, kind: input, shape index: {}]
  %s1 = inlined_call_operand.hbm [shape: f32[2,8,400], index: 1, kind: input, shape index: {}]
  %s2 = inlined_call_operand.hbm [shape: f32[4,2,16,400], index: 2, kind: input, shape index: {}]
  %s3 = inlined_call_operand.hbm [shape: f32[2,32,400], index: 3, kind: output, shape index: {}]
  %s4 = sld [smem:[#allocation0]]
  $region57: #{tpu_custom_call.1} parent=0
    _
  %s6 = ssub.s32 1, %s4
  %s7 = scalar_select 0, %s6, %s4
  $region1: #{tpu_custom_call.1} parent=0
    #allocation2 [shape = 'u8[131072]{0}', space=vmem, size = 0x20000, scoped, tag = 'input window, operand 0']
    #allocation3 [shape = 's32[2]{0}', space=sflag, size = 0x8, scoped, tag = 'scoped memory for tpu_custom_call.1']
    #allocation4 [shape = 's32[2]{0}', space=sflag, size = 0x8, scoped, tag = 'scoped memory for tpu_custom_call.1']
    #allocation5 [shape = 'u8[32768]{0}', space=vmem, size = 0x8000, scoped, tag = 'input window, operand 1']
    #allocation6 [shape = 's32[2]{0}', space=sflag, size = 0x8, scoped, tag = 'scoped memory for tpu_custom_call.1']
    #allocation7 [shape = 'u8[262144]{0}', space=vmem, size = 0x40000, scoped, tag = 'input window, operand 2']
    #allocation8 [shape = 'u8[131072]{0}', space=vmem, size = 0x20000, scoped, tag = 'output window, operand 0']
    %8 = vsyncpa [#allocation3], 0
    %s9 = scalar_lea.sflag [#allocation3], 1
    %10 = vsyncpa %s9, 0
    %11 = vsyncpa [#allocation6], 0
    %s12 = scalar_lea.sflag [#allocation6], 1
    %13 = vsyncpa %s12, 0
    %14 = vsyncpa [#allocation4], 0
    %s15 = scalar_lea.sflag [#allocation4], 1
    %16 = vsyncpa %s15, 0
    loop: start=0, step=1, limit=4
    $region2: #{tpu_custom_call.1} parent=1 // loop_pre_header
      _
    $region3: #{tpu_custom_call.1} parent=1 // loop_header
      %s18 = sphi 0, %s22
      %p19 = scmp.ge.s32.totalorder %s18, 4
      %s25 = sphi 0, %s37
      %s26 = sphi 0, %s33
      %s27 = sphi 0, %s25
      %s28 = sphi 0, %s26
      %s29 = sphi 0, %s27
      %s30 = sphi 0, %s28
      %s42 = sphi 0, %s44
      %s45 = sphi 0, %s42
      %s46 = sphi 0, %s45
      %s62 = sphi 0, %s46
      %s70 = sphi 0, %s72
      %s73 = sphi 0, %s70
      %s74 = sphi 0, %s73
      %s90 = sphi 0, %s74
      %s98 = sphi 0, %s100
      %s101 = sphi 0, %s98
      %s102 = sphi 0, %s101
      %s118 = sphi 0, %s102
      %s126 = sphi 0, %s128
      %s129 = sphi 0, %s126
      %s130 = sphi 0, %s129
      %s146 = sphi 0, %s130
    $region4: #{tpu_custom_call.1} parent=1 // loop_header_branch
      %21 = sbr.rel (%p19) target = $region8
    $region5: #{tpu_custom_call.1} parent=1 // loop_body
      %s23 = ssub.s32 %s18, 1
      %s24 = ssub.s32 %s18, 2
      %s31 = sadd.s32 1, %s26
      %p32 = scmp.ge.s32.totalorder %s31, 2
      %s33 = scalar_select %p32, 0, %s31
      %s34 = sadd.s32 1, %s25
      %s35 = scalar_select %p32, %s34, %s25
      %p36 = scmp.ge.s32.totalorder %s35, 1
      %s37 = scalar_select %p36, 0, %s35
      %s38 = ssub.s32 %s26, %s33
      %s39 = ssub.s32 %s25, %s37
      %s40 = sor.u32 %s38, %s39
      %p41 = scmp.eq.s32.totalorder %s40, 0
      %s43 = sadd.s32 %s42, 1
      %s44 = scalar_select %p41, %s42, %s43
      %p47 = pneg %p41
      %p48 = scmp.eq.s32.totalorder %s18, 1
      %p49 = por %p47, %p48
      %p50 = scmp.ne.s32.totalorder %s42, %s45
      %p51 = scmp.eq.s32.totalorder %s18, 0
      %p52 = por %p50, %p51
      %p53 = scmp.ne.s32.totalorder %s42, %s45
      %p54 = scmp.eq.s32.totalorder %s23, 1
      %p55 = por %p53, %p54
      %p56 = scmp.ne.s32.totalorder %s45, %s46
      %p57 = scmp.eq.s32.totalorder %s23, 0
      %p58 = por %p56, %p57
      %p59 = scmp.ne.s32.totalorder %s45, %s46
      %p60 = scmp.eq.s32.totalorder %s24, 1
      %p61 = por %p59, %p60
      %p63 = scmp.ne.s32.totalorder %s46, %s62
      %p64 = scmp.eq.s32.totalorder %s24, 0
      %p65 = por %p63, %p64
      %s66 = ssub.s32 %s26, %s33
      %s67 = ssub.s32 %s25, %s37
      %s68 = sor.u32 %s66, %s67
      %p69 = scmp.eq.s32.totalorder %s68, 0
      %s71 = sadd.s32 %s70, 1
      %s72 = scalar_select %p69, %s70, %s71
      %p75 = pneg %p69
      %p76 = scmp.eq.s32.totalorder %s18, 1
      %p77 = por %p75, %p76
      %p78 = scmp.ne.s32.totalorder %s70, %s73
      %p79 = scmp.eq.s32.totalorder %s18, 0
      %p80 = por %p78, %p79
      %p81 = scmp.ne.s32.totalorder %s70, %s73
      %p82 = scmp.eq.s32.totalorder %s23, 1
      %p83 = por %p81, %p82
      %p84 = scmp.ne.s32.totalorder %s73, %s74
      %p85 = scmp.eq.s32.totalorder %s23, 0
      %p86 = por %p84, %p85
      %p87 = scmp.ne.s32.totalorder %s73, %s74
      %p88 = scmp.eq.s32.totalorder %s24, 1
      %p89 = por %p87, %p88
      %p91 = scmp.ne.s32.totalorder %s74, %s90
      %p92 = scmp.eq.s32.totalorder %s24, 0
      %p93 = por %p91, %p92
      %s94 = ssub.s32 %s26, %s33
      %s95 = ssub.s32 %s25, %s37
      %s96 = sor.u32 %s94, %s95
      %p97 = scmp.eq.s32.totalorder %s96, 0
      %s99 = sadd.s32 %s98, 1
      %s100 = scalar_select %p97, %s98, %s99
      %p103 = pneg %p97
      %p104 = scmp.eq.s32.totalorder %s18, 1
      %p105 = por %p103, %p104
      %p106 = scmp.ne.s32.totalorder %s98, %s101
      %p107 = scmp.eq.s32.totalorder %s18, 0
      %p108 = por %p106, %p107
      %p109 = scmp.ne.s32.totalorder %s98, %s101
      %p110 = scmp.eq.s32.totalorder %s23, 1
      %p111 = por %p109, %p110
      %p112 = scmp.ne.s32.totalorder %s101, %s102
      %p113 = scmp.eq.s32.totalorder %s23, 0
      %p114 = por %p112, %p113
      %p115 = scmp.ne.s32.totalorder %s101, %s102
      %p116 = scmp.eq.s32.totalorder %s24, 1
      %p117 = por %p115, %p116
      %p119 = scmp.ne.s32.totalorder %s102, %s118
      %p120 = scmp.eq.s32.totalorder %s24, 0
      %p121 = por %p119, %p120
      %s122 = ssub.s32 %s26, %s33
      %s123 = ssub.s32 %s25, %s37
      %s124 = sor.u32 %s122, %s123
      %p125 = scmp.eq.s32.totalorder %s124, 0
      %s127 = sadd.s32 %s126, 1
      %s128 = scalar_select %p125, %s126, %s127
      %p131 = pneg %p125
      %p132 = scmp.eq.s32.totalorder %s18, 1
      %p133 = por %p131, %p132
      %p134 = scmp.ne.s32.totalorder %s126, %s129
      %p135 = scmp.eq.s32.totalorder %s18, 0
      %p136 = por %p134, %p135
      %p137 = scmp.ne.s32.totalorder %s126, %s129
      %p138 = scmp.eq.s32.totalorder %s23, 1
      %p139 = por %p137, %p138
      %p140 = scmp.ne.s32.totalorder %s129, %s130
      %p141 = scmp.eq.s32.totalorder %s23, 0
      %p142 = por %p140, %p141
      %p143 = scmp.ne.s32.totalorder %s129, %s130
      %p144 = scmp.eq.s32.totalorder %s24, 1
      %p145 = por %p143, %p144
      %p147 = scmp.ne.s32.totalorder %s130, %s146
      %p148 = scmp.eq.s32.totalorder %s24, 0
      %p149 = por %p147, %p148
      %p150 = scmp.le.s32.totalorder 1, %s18
      %p151 = scmp.lt.s32.totalorder %s18, 3
      %p152 = pnand %p150, %p151
      %p153 = pneg %p152
      // Predicated region
      $region9: #{tpu_custom_call.1} parent=5 // pred_check
        _
      $region10: #{tpu_custom_call.1} parent=5 // pred_check_branch
        %155 = sbr.rel (%p152) target = $region12
      $region11: #{tpu_custom_call.1} parent=5 // pred_region
        %s156 = ssub.s32 %s18, 1
      $region12: #{tpu_custom_call.1} parent=5 // pred_fallthru
        _
      %p157 = scmp.lt.s32.totalorder %s18, 2
      // Predicated region
      $region13: #{tpu_custom_call.1} parent=5 // pred_check
        %p158 = pneg %p157
      $region14: #{tpu_custom_call.1} parent=5 // pred_check_branch
        %160 = sbr.rel (%p158) target = $region16
      $region15: #{tpu_custom_call.1} parent=5 // pred_region
        // Predicated region
        $region17: #{tpu_custom_call.1} parent=15 // pred_check
          %p161 = pneg %p52
        $region18: #{tpu_custom_call.1} parent=15 // pred_check_branch
          %163 = sbr.rel (%p161) target = $region20
        $region19: #{tpu_custom_call.1} parent=15 // pred_region
          %s164 = sand.u32 %s42, 1
          %s165 = scalar_lea.sflag [#allocation3], %s164
          %s166 = sand.u32 %s42, 1
          %s167 = smul.addr %s166, 128
          %s168 = scalar_lea.vmem [#allocation2], %s167
          %s169 = smul.u32 4, %s25
          %s171 = ssub.s32 2048, 2048
          %172 = vsyncadd %s165, %s171
          %s173 = smul.addr %s26, 4
          %s174 = sadd.s32 %s169, %s173
          %s175 = smul.addr %s174, 128
          %s176 = scalar_lea.hbm %s0, %s175
          %s177 = sshll.u32 %s168, 4
          %s178 = int_to_ptr.vmem [resolvable:$true] %s177
          %183 = dma.hbm_to_vmem [thread:$0]  %s176, 2048, %s178, %s165, 1024, 512, 32
        $region20: #{tpu_custom_call.1} parent=15 // pred_fallthru
          _
        // Predicated region
        $region21: #{tpu_custom_call.1} parent=15 // pred_check
          %p184 = pneg %p80
        $region22: #{tpu_custom_call.1} parent=15 // pred_check_branch
          %186 = sbr.rel (%p184) target = $region24
        $region23: #{tpu_custom_call.1} parent=15 // pred_region
          %s187 = sand.u32 %s18, 1
          %s188 = scalar_lea.sflag [#allocation6], %s187
          %s189 = sand.u32 %s70, 1
          %s190 = smul.addr %s189, 32
          %s191 = scalar_lea.vmem [#allocation5], %s190
          %s192 = smul.u32 4, %s25
          %s194 = ssub.s32 512, 512
          %195 = vsyncadd %s188, %s194
          %s196 = smul.addr %s26, 4
          %s197 = sadd.s32 %s192, %s196
          %s198 = smul.addr %s197, 128
          %s199 = scalar_lea.hbm %s1, %s198
          %s201 = sshll.u32 %s191, 4
          %s202 = int_to_ptr.vmem [resolvable:$true] %s201
          %204 = dma.hbm_to_vmem [thread:$0]  %s199, 512, %s202, %s188
        $region24: #{tpu_custom_call.1} parent=15 // pred_fallthru
          _
        // Predicated region
        $region25: #{tpu_custom_call.1} parent=15 // pred_check
          %p205 = pneg %p108
        $region26: #{tpu_custom_call.1} parent=15 // pred_check_branch
          %207 = sbr.rel (%p205) target = $region28
        $region27: #{tpu_custom_call.1} parent=15 // pred_region
          #allocation10 [shape = 'u32[6]{0}', space=smem, size = 0x18, scoped, tag = 'DMA stride descriptor']
          %s208 = sand.u32 %s18, 1
          %s209 = scalar_lea.sflag [#allocation6], %s208
          %s210 = sand.u32 %s98, 1
          %s211 = smul.addr %s210, 256
          %s212 = scalar_lea.vmem [#allocation7], %s211
          %s213 = smul.u32 4, %s25
          %s215 = ssub.s32 4096, 4096
          %216 = vsyncadd %s209, %s215
          %s217 = smul.addr %s26, 8
          %s218 = sadd.s32 %s213, %s217
          %s219 = smul.addr %s218, 128
          %s220 = scalar_lea.hbm %s2, %s219
          %s222 = sshll.u32 1, 14
          %s223 = sxor.u32 4294967295, %s222
          %s225 = sld [smem:[#allocation0]]
          %s226 = sadd.s32 2, %s225
          %s228 = sshll.u32 7, 26
          %s229 = sxor.u32 4294967295, %s228
          %s230 = sand.u32 0, %s229
          %s231 = sshll.u32 %s226, 26
          %s232 = sor.u32 %s230, %s231
          %s233 = sshll.u32 %s212, 4
          %s234 = int_to_ptr.vmem [resolvable:$true] %s233
          %240 = sst [smem:[#allocation10]] 2048
          %s241 = scalar_lea.smem [#allocation10], 1
          %242 = sst [smem:[%s241]] 1024
          %s243 = scalar_lea.smem [#allocation10], 2
          %244 = sst [smem:[%s243]] 2
          %s245 = scalar_lea.smem [#allocation10], 3
          %246 = sst [smem:[%s245]] 512
          %s247 = scalar_lea.smem [#allocation10], 4
          %248 = sst [smem:[%s247]] 512
          %s249 = scalar_lea.smem [#allocation10], 5
          %250 = sst [smem:[%s249]] 32
          %252 = dma.general %s220, 4096, %s234, %s209, 131072, [#allocation10], %s232, 0
        $region28: #{tpu_custom_call.1} parent=15 // pred_fallthru
          _
      $region16: #{tpu_custom_call.1} parent=5 // pred_fallthru
        _
      %p253 = scmp.le.s32.totalorder 1, %s18
      %p254 = scmp.lt.s32.totalorder %s18, 3
      %p255 = pnand %p253, %p254
      %p256 = pneg %p255
      // Predicated region
      $region29: #{tpu_custom_call.1} parent=5 // pred_check
        _
      $region30: #{tpu_custom_call.1} parent=5 // pred_check_branch
        %258 = sbr.rel (%p255) target = $region32
      $region31: #{tpu_custom_call.1} parent=5 // pred_region
        %s259 = ssub.s32 %s18, 1
        %s260 = sand.u32 %s45, 1
        %s261 = scalar_lea.sflag [#allocation3], %s260
        %s262 = sand.u32 %s45, 1
        %s263 = smul.addr %s262, 128
        %s264 = scalar_lea.vmem [#allocation2], %s263
        // Predicated region
        $region33: #{tpu_custom_call.1} parent=31 // pred_check
          %p265 = pneg %p58
        $region34: #{tpu_custom_call.1} parent=31 // pred_check_branch
          %267 = sbr.rel (%p265) target = $region36
        $region35: #{tpu_custom_call.1} parent=31 // pred_region
          %268 = dma.done %s261, 2048
        $region36: #{tpu_custom_call.1} parent=31 // pred_fallthru
          _
        %s269 = sand.u32 %s23, 1
        %s270 = scalar_lea.sflag [#allocation6], %s269
        %s271 = sand.u32 %s73, 1
        %s272 = smul.addr %s271, 32
        %s273 = scalar_lea.vmem [#allocation5], %s272
        // Predicated region
        $region37: #{tpu_custom_call.1} parent=31 // pred_check
          %p274 = pneg %p86
        $region38: #{tpu_custom_call.1} parent=31 // pred_check_branch
          %276 = sbr.rel (%p274) target = $region40
        $region39: #{tpu_custom_call.1} parent=31 // pred_region
          %277 = dma.done %s270, 512
        $region40: #{tpu_custom_call.1} parent=31 // pred_fallthru
          _
        %s278 = sand.u32 %s23, 1
        %s279 = scalar_lea.sflag [#allocation6], %s278
        %s280 = sand.u32 %s101, 1
        %s281 = smul.addr %s280, 256
        %s282 = scalar_lea.vmem [#allocation7], %s281
        // Predicated region
        $region41: #{tpu_custom_call.1} parent=31 // pred_check
          %p283 = pneg %p114
        $region42: #{tpu_custom_call.1} parent=31 // pred_check_branch
          %285 = sbr.rel (%p283) target = $region44
        $region43: #{tpu_custom_call.1} parent=31 // pred_region
          %286 = dma.done %s279, 4096
        $region44: #{tpu_custom_call.1} parent=31 // pred_fallthru
          _
        %s287 = sand.u32 %s45, 1
        %s288 = scalar_lea.sflag [#allocation3], %s287
        %s289 = sand.u32 %s45, 1
        %s290 = smul.addr %s289, 128
        %s291 = scalar_lea.vmem [#allocation2], %s290
        %p292 = pneg %p58
        %p293 = pneg %p55
        %s294 = sand.u32 %s23, 1
        %s295 = scalar_lea.sflag [#allocation6], %s294
        %s296 = sand.u32 %s73, 1
        %s297 = smul.addr %s296, 32
        %s298 = scalar_lea.vmem [#allocation5], %s297
        %p299 = pneg %p86
        %p300 = pneg %p83
        %s301 = sand.u32 %s23, 1
        %s302 = scalar_lea.sflag [#allocation6], %s301
        %s303 = sand.u32 %s101, 1
        %s304 = smul.addr %s303, 256
        %s305 = scalar_lea.vmem [#allocation7], %s304
        %p306 = pneg %p114
        %p307 = pneg %p111
        %p308 = pneg %p142
        %p309 = pneg %p139
        %s310 = sand.u32 %s129, 1
        %s311 = scalar_lea.sflag [#allocation4], %s310
        %s312 = sand.u32 %s129, 1
        %s313 = smul.addr %s312, 128
        %s314 = scalar_lea.vmem [#allocation8], %s313
        %s315 = smul.u32 4, %s27
        %s316 = smul.u32 4, %s27
        %s317 = smul.u32 4, %s27
        %s318 = smul.u32 4, %s27
        %v319 = vld [vmem:[%s264] sm:$0xff]
        %v320 = vld [vmem:[%s264 + $0x8] sm:$0xff]
        %v321 = vld [vmem:[%s264 + $0x10] sm:$0xff]
        %v322 = vld [vmem:[%s264 + $0x18] sm:$0xff]
        %s323 = scalar_lea.vmem %s264, 32 [#allocation2]
        %v324 = vld [vmem:[%s323] sm:$0xff]
        %v325 = vld [vmem:[%s323 + $0x8] sm:$0xff]
        %v326 = vld [vmem:[%s323 + $0x10] sm:$0xff]
        %v327 = vld [vmem:[%s323 + $0x18] sm:$0xff]
        %v328 = vadd.f32 %v319, %v324
        %v329 = vadd.f32 %v320, %v325
        %v330 = vadd.f32 %v321, %v326
        %v331 = vadd.f32 %v322, %v327
        %s332 = scalar_lea.vmem %s264, 64 [#allocation2]
        %v333 = vld [vmem:[%s332] sm:$0xff]
        %v334 = vld [vmem:[%s332 + $0x8] sm:$0xff]
        %v335 = vld [vmem:[%s332 + $0x10] sm:$0xff]
        %v336 = vld [vmem:[%s332 + $0x18] sm:$0xff]
        %v337 = vadd.f32 %v328, %v333
        %v338 = vadd.f32 %v329, %v334
        %v339 = vadd.f32 %v330, %v335
        %v340 = vadd.f32 %v331, %v336
        %s341 = scalar_lea.vmem %s264, 96 [#allocation2]
        %v342 = vld [vmem:[%s341] sm:$0xff]
        %v343 = vld [vmem:[%s341 + $0x8] sm:$0xff]
        %v344 = vld [vmem:[%s341 + $0x10] sm:$0xff]
        %v345 = vld [vmem:[%s341 + $0x18] sm:$0xff]
        %v346 = vadd.f32 %v337, %v342
        %v347 = vadd.f32 %v338, %v343
        %v348 = vadd.f32 %v339, %v344
        %v349 = vadd.f32 %v340, %v345
        %v350 = vmul.f32 %v346, 0.25
        %v351 = vmul.f32 %v347, 0.25
        %v352 = vmul.f32 %v348, 0.25
        %v353 = vmul.f32 %v349, 0.25
        %354 = vst [vmem:[%s314] sm:$0xff] %v350
        %355 = vst [vmem:[%s314 + $0x8] sm:$0xff] %v351
        %356 = vst [vmem:[%s314 + $0x10] sm:$0xff] %v352
        %357 = vst [vmem:[%s314 + $0x18] sm:$0xff] %v353
        %v358 = vld [vmem:[%s273] sm:$0xff]
        %v359 = vld [vmem:[%s273 + $0x8] sm:$0xff]
        %v360 = vld [vmem:[%s273 + $0x10] sm:$0xff]
        %v361 = vld [vmem:[%s273 + $0x18] sm:$0xff]
        %362 = vst [vmem:[%s314 + $0x20] sm:$0xff] %v358
        %363 = vst [vmem:[%s314 + $0x28] sm:$0xff] %v359
        %364 = vst [vmem:[%s314 + $0x30] sm:$0xff] %v360
        %365 = vst [vmem:[%s314 + $0x38] sm:$0xff] %v361
        %v366 = vld [vmem:[%s282] sm:$0xff]
        %v367 = vld [vmem:[%s282 + $0x8] sm:$0xff]
        %v368 = vld [vmem:[%s282 + $0x10] sm:$0xff]
        %v369 = vld [vmem:[%s282 + $0x18] sm:$0xff]
        %v370 = vld [vmem:[%s282 + $0x20] sm:$0xff]
        %v371 = vld [vmem:[%s282 + $0x28] sm:$0xff]
        %v372 = vld [vmem:[%s282 + $0x30] sm:$0xff]
        %v373 = vld [vmem:[%s282 + $0x38] sm:$0xff]
        %s374 = scalar_lea.vmem %s282, 64 [#allocation7]
        %v375 = vld [vmem:[%s374] sm:$0xff]
        %v376 = vld [vmem:[%s374 + $0x8] sm:$0xff]
        %v377 = vld [vmem:[%s374 + $0x10] sm:$0xff]
        %v378 = vld [vmem:[%s374 + $0x18] sm:$0xff]
        %v379 = vld [vmem:[%s374 + $0x20] sm:$0xff]
        %v380 = vld [vmem:[%s374 + $0x28] sm:$0xff]
        %v381 = vld [vmem:[%s374 + $0x30] sm:$0xff]
        %v382 = vld [vmem:[%s374 + $0x38] sm:$0xff]
        %v383 = vadd.f32 %v366, %v375
        %v384 = vadd.f32 %v367, %v376
        %v385 = vadd.f32 %v368, %v377
        %v386 = vadd.f32 %v369, %v378
        %v387 = vadd.f32 %v370, %v379
        %v388 = vadd.f32 %v371, %v380
        %v389 = vadd.f32 %v372, %v381
        %v390 = vadd.f32 %v373, %v382
        %s391 = scalar_lea.vmem %s282, 128 [#allocation7]
        %v392 = vld [vmem:[%s391] sm:$0xff]
        %v393 = vld [vmem:[%s391 + $0x8] sm:$0xff]
        %v394 = vld [vmem:[%s391 + $0x10] sm:$0xff]
        %v395 = vld [vmem:[%s391 + $0x18] sm:$0xff]
        %v396 = vld [vmem:[%s391 + $0x20] sm:$0xff]
        %v397 = vld [vmem:[%s391 + $0x28] sm:$0xff]
        %v398 = vld [vmem:[%s391 + $0x30] sm:$0xff]
        %v399 = vld [vmem:[%s391 + $0x38] sm:$0xff]
        %v400 = vadd.f32 %v383, %v392
        %v401 = vadd.f32 %v384, %v393
        %v402 = vadd.f32 %v385, %v394
        %v403 = vadd.f32 %v386, %v395
        %v404 = vadd.f32 %v387, %v396
        %v405 = vadd.f32 %v388, %v397
        %v406 = vadd.f32 %v389, %v398
        %v407 = vadd.f32 %v390, %v399
        %s408 = scalar_lea.vmem %s282, 192 [#allocation7]
        %v409 = vld [vmem:[%s408] sm:$0xff]
        %v410 = vld [vmem:[%s408 + $0x8] sm:$0xff]
        %v411 = vld [vmem:[%s408 + $0x10] sm:$0xff]
        %v412 = vld [vmem:[%s408 + $0x18] sm:$0xff]
        %v413 = vld [vmem:[%s408 + $0x20] sm:$0xff]
        %v414 = vld [vmem:[%s408 + $0x28] sm:$0xff]
        %v415 = vld [vmem:[%s408 + $0x30] sm:$0xff]
        %v416 = vld [vmem:[%s408 + $0x38] sm:$0xff]
        %v417 = vadd.f32 %v400, %v409
        %v418 = vadd.f32 %v401, %v410
        %v419 = vadd.f32 %v402, %v411
        %v420 = vadd.f32 %v403, %v412
        %v421 = vadd.f32 %v404, %v413
        %v422 = vadd.f32 %v405, %v414
        %v423 = vadd.f32 %v406, %v415
        %v424 = vadd.f32 %v407, %v416
        %v425 = vmul.f32 %v417, 0.25
        %v426 = vmul.f32 %v418, 0.25
        %v427 = vmul.f32 %v419, 0.25
        %v428 = vmul.f32 %v420, 0.25
        %v429 = vmul.f32 %v421, 0.25
        %v430 = vmul.f32 %v422, 0.25
        %v431 = vmul.f32 %v423, 0.25
        %v432 = vmul.f32 %v424, 0.25
        %433 = vst [vmem:[%s314 + $0x40] sm:$0xff] %v425
        %434 = vst [vmem:[%s314 + $0x48] sm:$0xff] %v426
        %435 = vst [vmem:[%s314 + $0x50] sm:$0xff] %v427
        %436 = vst [vmem:[%s314 + $0x58] sm:$0xff] %v428
        %437 = vst [vmem:[%s314 + $0x60] sm:$0xff] %v429
        %438 = vst [vmem:[%s314 + $0x68] sm:$0xff] %v430
        %439 = vst [vmem:[%s314 + $0x70] sm:$0xff] %v431
        %440 = vst [vmem:[%s314 + $0x78] sm:$0xff] %v432
        %s441 = sand.u32 %s129, 1
        %s442 = scalar_lea.sflag [#allocation4], %s441
        %s443 = sand.u32 %s129, 1
        %s444 = smul.addr %s443, 128
        %s445 = scalar_lea.vmem [#allocation8], %s444
        // Predicated region
        $region45: #{tpu_custom_call.1} parent=31 // pred_check
          %p446 = pneg %p139
        $region46: #{tpu_custom_call.1} parent=31 // pred_check_branch
          %448 = sbr.rel (%p446) target = $region48
        $region47: #{tpu_custom_call.1} parent=31 // pred_region
          %s449 = smul.u32 4, %s27
          %s451 = ssub.s32 2048, 2048
          %452 = vsyncadd %s442, %s451
          %s453 = smul.addr %s28, 16
          %s454 = sadd.s32 %s449, %s453
          %s455 = smul.addr %s454, 128
          %s456 = scalar_lea.hbm %s3, %s455
          %s457 = sshll.u32 %s445, 4
          %s458 = int_to_ptr.vmem [resolvable:$true] %s457
          %463 = dma.vmem_to_hbm [thread:$0]  %s458, 2048, %s456, %s442, 512, 512, 32
        $region48: #{tpu_custom_call.1} parent=31 // pred_fallthru
          _
      $region32: #{tpu_custom_call.1} parent=5 // pred_fallthru
        _
      %p464 = scmp.le.s32.totalorder 2, %s18
      // Predicated region
      $region49: #{tpu_custom_call.1} parent=5 // pred_check
        %p465 = pneg %p464
      $region50: #{tpu_custom_call.1} parent=5 // pred_check_branch
        %467 = sbr.rel (%p465) target = $region52
      $region51: #{tpu_custom_call.1} parent=5 // pred_region
        %s468 = ssub.s32 %s18, 2
        // Predicated region
        $region53: #{tpu_custom_call.1} parent=51 // pred_check
          %p469 = pneg %p145
        $region54: #{tpu_custom_call.1} parent=51 // pred_check_branch
          %471 = sbr.rel (%p469) target = $region56
        $region55: #{tpu_custom_call.1} parent=51 // pred_region
          %s472 = sand.u32 %s130, 1
          %s473 = scalar_lea.sflag [#allocation4], %s472
          %s474 = sand.u32 %s130, 1
          %s475 = smul.addr %s474, 128
          %s476 = scalar_lea.vmem [#allocation8], %s475
          %477 = dma.done %s473, 2048
        $region56: #{tpu_custom_call.1} parent=51 // pred_fallthru
          _
      $region52: #{tpu_custom_call.1} parent=5 // pred_fallthru
        _
    $region6: #{tpu_custom_call.1} parent=1 // loop_footer
      %s22 = sadd.s32 1, %s18
    $region7: #{tpu_custom_call.1} parent=1 // loop_footer_branch
      %17 = sbr.rel target = $region3
    $region8: #{tpu_custom_call.1} parent=1 // loop_exit
      _
    %478 = vsyncpa [#allocation3], 1
    %s479 = scalar_lea.sflag [#allocation3], 1
    %480 = vsyncpa %s479, 1
    %481 = vsyncpa [#allocation6], 1
    %s482 = scalar_lea.sflag [#allocation6], 1
    %483 = vsyncpa %s482, 1
    %484 = vsyncpa [#allocation4], 1
    %s485 = scalar_lea.sflag [#allocation4], 1
    %486 = vsyncpa %s485, 1

</llo_original>
